<compile_context>
chip_gen: v7x
topology: tpu7x:2x2x1
jax: 0.10.0
libtpu: 0.0.40
codegen_flags: <defaults>
</compile_context>

<pallas_src>
import jax
import jax.numpy as jnp
from jax.experimental import pallas as pl
from jax.experimental.pallas import tpu as pltpu


# ---------------------------------------------------------------------------
# Kernels
# ---------------------------------------------------------------------------

def _critic_kernel_fused(x_ref, w_in_ref, w_mid_ref, w_out_ref, b_ref, q_ref):
    """Twin heads fused: hidden layers are block-diagonal (2H, 2H) matmuls."""
    b = b_ref[...]                                             # (4, 2H) f32
    cdt = w_in_ref.dtype

    h = jnp.dot(x_ref[...], w_in_ref[...], preferred_element_type=jnp.float32)
    h = jnp.maximum(h + b[0:1, :], 0.0)                        # (bb, 2H) f32

    h = jnp.dot(h.astype(cdt), w_mid_ref[0], preferred_element_type=jnp.float32)
    h = jnp.maximum(h + b[1:2, :], 0.0)

    h = jnp.dot(h.astype(cdt), w_mid_ref[1], preferred_element_type=jnp.float32)
    h = jnp.maximum(h + b[2:3, :], 0.0)

    q_ref[...] = (jnp.dot(h.astype(cdt), w_out_ref[...],
                          preferred_element_type=jnp.float32) + b[3:4, 0:2])


def _critic_kernel_split(x_ref, w_in_ref, w_mid_ref, w_out_ref, b_ref, q_ref):
    """v5e variant: hidden layers run as two 128-wide dots (no zero tiles)."""
    b = b_ref[...]                                             # (4, 2H) f32
    cdt = w_in_ref.dtype
    H = w_mid_ref.shape[-1]

    h = jnp.dot(x_ref[...], w_in_ref[...], preferred_element_type=jnp.float32)
    h = jnp.maximum(h + b[0:1, :], 0.0)                        # (bb, 2H) f32

    for layer in range(2):                                     # unrolled at trace time
        hc = h.astype(cdt)
        h1 = jnp.dot(hc[:, :H], w_mid_ref[layer, 0],
                     preferred_element_type=jnp.float32)
        h2 = jnp.dot(hc[:, H:], w_mid_ref[layer, 1],
                     preferred_element_type=jnp.float32)
        h = jnp.maximum(jnp.concatenate([h1, h2], axis=1)
                        + b[layer + 1:layer + 2, :], 0.0)

    q_ref[...] = (jnp.dot(h.astype(cdt), w_out_ref[...],
                          preferred_element_type=jnp.float32) + b[3:4, 0:2])


# ---------------------------------------------------------------------------
# Parameter init / packing
# ---------------------------------------------------------------------------

def init_critic_params(key, state_dim, goal_dim, action_dim, hidden_dim=128):
    """Per-layer params mimicking nn.Linear default init.

    Weights stored as (in_features, out_features) (transposed vs. PyTorch),
    biases as (1, out_features).
    """
    in_dim = state_dim + goal_dim + action_dim
    dims = [
        (in_dim, hidden_dim),      # fc1
        (hidden_dim, hidden_dim),  # fc2
        (hidden_dim, hidden_dim),  # fc3
        (hidden_dim, 1),           # fc4
        (in_dim, hidden_dim),      # fc6
        (hidden_dim, hidden_dim),  # fc7
        (hidden_dim, hidden_dim),  # fc8
        (hidden_dim, 1),           # fc9
    ]
    params = []
    for (fan_in, fan_out) in dims:
        key, kw, kb = jax.random.split(key, 3)
        bound = 1.0 / jnp.sqrt(float(fan_in))
        w = jax.random.uniform(kw, (fan_in, fan_out), jnp.float32, -bound, bound)
        b = jax.random.uniform(kb, (1, fan_out), jnp.float32, -bound, bound)
        params.append((w, b))
    return params


def _is_v5e():
    try:
        kind = jax.devices()[0].device_kind.lower()
        return ("v5 lite" in kind) or ("v5e" in kind) or ("v5lite" in kind)
    except Exception:
        return False


def pack_critic_params(params, hidden_dim=128, *, fuse_hidden=None,
                       compute_dtype=jnp.bfloat16):
    """One-time host-side fusion of the twin heads.

    Returns (w_in, w_mid, w_out, b_pack) where:
      w_in : (D_in, 2H)                  [W1 || W6]        (compute_dtype)
      w_mid: (2, 2H, 2H) block-diagonal  (fuse_hidden)     (compute_dtype)
             or (2, 2, H, H) stacked     (not fuse_hidden)
      w_out: (2H, 2)  column 0 <- q1 head, column 1 <- q2 head (compute_dtype)
      b_pack: (4, 2H) packed biases (f32)
    """
    if fuse_hidden is None:
        fuse_hidden = not _is_v5e()

    (w1, b1), (w2, b2), (w3, b3), (w4, b4), \
        (w6, b6), (w7, b7), (w8, b8), (w9, b9) = params
    H = hidden_dim

    # First layer: [W1 || W6] -> (D_in, 2H).
    w_in = jnp.concatenate([w1, w6], axis=1)

    # Hidden layers.
    if fuse_hidden:
        z = jnp.zeros((H, H), jnp.float32)
        w_mid = jnp.stack([
            jnp.block([[w2, z], [z, w7]]),
            jnp.block([[w3, z], [z, w8]]),
        ], axis=0)                                   # (2, 2H, 2H)
    else:
        w_mid = jnp.stack([
            jnp.stack([w2, w7], axis=0),
            jnp.stack([w3, w8], axis=0),
        ], axis=0)                                   # (2, 2, H, H)

    # Output projection (2H, 2).
    zc = jnp.zeros((H, 1), jnp.float32)
    w_out = jnp.concatenate([
        jnp.concatenate([w4, zc], axis=1),
        jnp.concatenate([zc, w9], axis=1),
    ], axis=0)

    # Biases packed into a single (4, 2H) f32 array.
    b_last = jnp.zeros((1, 2 * H), jnp.float32)
    b_last = b_last.at[0, 0].set(b4[0, 0]).at[0, 1].set(b9[0, 0])
    b_pack = jnp.concatenate([
        jnp.concatenate([b1, b6], axis=1),
        jnp.concatenate([b2, b7], axis=1),
        jnp.concatenate([b3, b8], axis=1),
        b_last,
    ], axis=0)

    return (w_in.astype(compute_dtype),
            w_mid.astype(compute_dtype),
            w_out.astype(compute_dtype),
            b_pack.astype(jnp.float32))


# ---------------------------------------------------------------------------
# Wrapper
# ---------------------------------------------------------------------------

def _round_up(x, m):
    return (x + m - 1) // m * m


def critic_forward(s, g, a, packed, *, batch_block=None):
    w_in, w_mid, w_out, b_pack = packed
    cdt = w_in.dtype

    # Layout plumbing in the wrapper: single concatenated input stream.
    x = jnp.concatenate([s, g, a], axis=1).astype(cdt)         # (B, D_in)
    B, d_in = x.shape
    H2 = w_in.shape[1]

    # Batch-block heuristic: big blocks (low per-step overhead), but >= 2 grid
    # steps for very large B so the 'parallel' axis shards across v7x's 2 TCs.
    if batch_block is None:
        if B <= 2048:
            batch_block = _round_up(B, 8)
        else:
            batch_block = min(2048, _round_up(pl.cdiv(B, 2), 8))
    bb = max(8, _round_up(batch_block, 8))

    # Ragged batches: zero-pad to a block multiple, slice the result back.
    B_pad = _round_up(B, bb)
    if B_pad != B:
        x = jnp.pad(x, ((0, B_pad - B), (0, 0)))
    grid = (B_pad // bb,)

    fused = (w_mid.ndim == 3)
    kernel = _critic_kernel_fused if fused else _critic_kernel_split
    mid_map = (lambda i: (0, 0, 0)) if fused else (lambda i: (0, 0, 0, 0))

    q = pl.pallas_call(
        kernel,
        out_shape=jax.ShapeDtypeStruct((B_pad, 2), jnp.float32),
        grid_spec=pltpu.PrefetchScalarGridSpec(
            num_scalar_prefetch=0,
            grid=grid,
            in_specs=[
                pl.BlockSpec((bb, d_in), lambda i: (i, 0)),        # x tile
                pl.BlockSpec(w_in.shape, lambda i: (0, 0)),        # fused layer-1 W
                pl.BlockSpec(w_mid.shape, mid_map),                # hidden weights
                pl.BlockSpec(w_out.shape, lambda i: (0, 0)),       # output W
                pl.BlockSpec(b_pack.shape, lambda i: (0, 0)),      # packed biases
            ],
            out_specs=pl.BlockSpec((bb, 2), lambda i: (i, 0)),
        ),
        compiler_params=pltpu.CompilerParams(
            dimension_semantics=("parallel",),
        ),
    )(x, w_in, w_mid, w_out, b_pack)

    q = q[:B]
    # Split to match the PyTorch module's (q1, q2) return signature.
    return q[:, 0:1], q[:, 1:2]


# ---------------------------------------------------------------------------
# Pure-JAX reference of the original (unfused) net
# ---------------------------------------------------------------------------

def _reference_forward(s, g, a, params):
    x = jnp.concatenate([s, g, a], axis=1).astype(jnp.float32)
    (w1, b1), (w2, b2), (w3, b3), (w4, b4), \
        (w6, b6), (w7, b7), (w8, b8), (w9, b9) = params
    h1 = jax.nn.relu(x @ w1 + b1)
    h1 = jax.nn.relu(h1 @ w2 + b2)
    h1 = jax.nn.relu(h1 @ w3 + b3)
    q1 = h1 @ w4 + b4
    h2 = jax.nn.relu(x @ w6 + b6)
    h2 = jax.nn.relu(h2 @ w7 + b7)
    h2 = jax.nn.relu(h2 @ w8 + b8)
    q2 = h2 @ w9 + b9
    return q1, q2


if __name__ == "__main__":
    state_dim, goal_dim, action_dim, hidden_dim = 17, 3, 4, 128
    batch = 8

    key = jax.random.PRNGKey(0)
    kp, ks, kg, ka = jax.random.split(key, 4)

    params = init_critic_params(kp, state_dim, goal_dim, action_dim, hidden_dim)

    s = jax.random.normal(ks, (batch, state_dim), jnp.float32)
    g = jax.random.normal(kg, (batch, goal_dim), jnp.float32)
    a = jax.random.normal(ka, (batch, action_dim), jnp.float32)

    r1, r2 = _reference_forward(s, g, a, params)

    # Exercise both the fused (v6e/v7x) and split (v5e) hidden-layer variants.
    ok = True
    for fuse in (True, False):
        packed = pack_critic_params(params, hidden_dim, fuse_hidden=fuse)
        q1, q2 = critic_forward(s, g, a, packed)
        jax.block_until_ready((q1, q2))
        ok &= (q1.shape == (batch, 1)) and (q2.shape == (batch, 1))
        # bf16 matmul operands (f32 accumulation) -> loosened tolerance.
        ok &= bool(jnp.allclose(q1, r1, atol=5e-2, rtol=5e-2))
        ok &= bool(jnp.allclose(q2, r2, atol=5e-2, rtol=5e-2))

    assert ok
    print("KERNEL_OK")
</pallas_src>

<mosaic_0001>
module attributes {stable_mosaic.version = 11 : i64} {
  func.func @_critic_kernel_fused(%arg0: i32, %arg1: memref<8x24xbf16, #tpu.memory_space<vmem>>, %arg2: memref<24x256xbf16, #tpu.memory_space<vmem>>, %arg3: memref<2x256x256xbf16, #tpu.memory_space<vmem>>, %arg4: memref<256x2xbf16, #tpu.memory_space<vmem>>, %arg5: memref<4x256xf32, #tpu.memory_space<vmem>>, %arg6: memref<8x2xf32, #tpu.memory_space<vmem>>) attributes {dimension_semantics = [#tpu.dimension_semantics<parallel>], iteration_bounds = array<i64: 1>, scalar_prefetch = 0 : i64, scratch_operands = 0 : i64, tpu.core_type = #tpu.core_type<tc>, window_params = [{transform_indices = @transform_0, window_bounds = array<i64: 8, 24>}, {pipeline_mode = #tpu.pipeline_mode<synchronous>, transform_indices = @transform_1, window_bounds = array<i64: 24, 256>}, {pipeline_mode = #tpu.pipeline_mode<synchronous>, transform_indices = @transform_2, window_bounds = array<i64: 2, 256, 256>}, {pipeline_mode = #tpu.pipeline_mode<synchronous>, transform_indices = @transform_3, window_bounds = array<i64: 256, 2>}, {pipeline_mode = #tpu.pipeline_mode<synchronous>, transform_indices = @transform_4, window_bounds = array<i64: 4, 256>}, {transform_indices = @transform_5, window_bounds = array<i64: 8, 2>}]} {
    %c0 = arith.constant 0 : index
    %c0_0 = arith.constant 0 : index
    %0 = vector.load %arg5[%c0, %c0_0] : memref<4x256xf32, #tpu.memory_space<vmem>>, vector<4x256xf32>
    %c0_1 = arith.constant 0 : index
    %c0_2 = arith.constant 0 : index
    %1 = vector.load %arg1[%c0_1, %c0_2] : memref<8x24xbf16, #tpu.memory_space<vmem>>, vector<8x24xbf16>
    %c0_3 = arith.constant 0 : index
    %c0_4 = arith.constant 0 : index
    %2 = vector.load %arg2[%c0_3, %c0_4] : memref<24x256xbf16, #tpu.memory_space<vmem>>, vector<24x256xbf16>
    %cst = arith.constant dense<0.000000e+00> : vector<8x256xf32>
    %3 = tpu.matmul %1, %2, %cst {dimension_numbers = #tpu.dot_dimension_numbers<[1], [0], [0], [1], [0, 0, 1, 1], [], []>} : vector<8x24xbf16>, vector<24x256xbf16>, vector<8x256xf32> -> vector<8x256xf32>
    %4 = vector.extract_strided_slice %0 {offsets = [0, 0], sizes = [1, 256], strides = [1, 1]} : vector<4x256xf32> to vector<1x256xf32>
    %5 = vector.broadcast %4 : vector<1x256xf32> to vector<8x256xf32>
    %6 = arith.addf %3, %5 : vector<8x256xf32>
    %cst_5 = arith.constant 0.000000e+00 : f32
    %7 = vector.broadcast %cst_5 : f32 to vector<8x256xf32>
    %8 = arith.maximumf %6, %7 : vector<8x256xf32>
    %9 = arith.truncf %8 : vector<8x256xf32> to vector<8x256xbf16>
    %c0_6 = arith.constant 0 : index
    %c0_7 = arith.constant 0 : index
    %c0_8 = arith.constant 0 : index
    %10 = vector.load %arg3[%c0_6, %c0_7, %c0_8] : memref<2x256x256xbf16, #tpu.memory_space<vmem>>, vector<1x256x256xbf16>
    %11 = vector.shape_cast %10 : vector<1x256x256xbf16> to vector<256x256xbf16>
    %cst_9 = arith.constant dense<0.000000e+00> : vector<8x256xf32>
    %12 = tpu.matmul %9, %11, %cst_9 {dimension_numbers = #tpu.dot_dimension_numbers<[1], [0], [0], [1], [0, 0, 1, 1], [], []>} : vector<8x256xbf16>, vector<256x256xbf16>, vector<8x256xf32> -> vector<8x256xf32>
    %13 = vector.extract_strided_slice %0 {offsets = [1, 0], sizes = [1, 256], strides = [1, 1]} : vector<4x256xf32> to vector<1x256xf32>
    %14 = vector.broadcast %13 : vector<1x256xf32> to vector<8x256xf32>
    %15 = arith.addf %12, %14 : vector<8x256xf32>
    %cst_10 = arith.constant 0.000000e+00 : f32
    %16 = vector.broadcast %cst_10 : f32 to vector<8x256xf32>
    %17 = arith.maximumf %15, %16 : vector<8x256xf32>
    %18 = arith.truncf %17 : vector<8x256xf32> to vector<8x256xbf16>
    %c1 = arith.constant 1 : index
    %c0_11 = arith.constant 0 : index
    %c0_12 = arith.constant 0 : index
    %19 = vector.load %arg3[%c1, %c0_11, %c0_12] : memref<2x256x256xbf16, #tpu.memory_space<vmem>>, vector<1x256x256xbf16>
    %20 = vector.shape_cast %19 : vector<1x256x256xbf16> to vector<256x256xbf16>
    %cst_13 = arith.constant dense<0.000000e+00> : vector<8x256xf32>
    %21 = tpu.matmul %18, %20, %cst_13 {dimension_numbers = #tpu.dot_dimension_numbers<[1], [0], [0], [1], [0, 0, 1, 1], [], []>} : vector<8x256xbf16>, vector<256x256xbf16>, vector<8x256xf32> -> vector<8x256xf32>
    %22 = vector.extract_strided_slice %0 {offsets = [2, 0], sizes = [1, 256], strides = [1, 1]} : vector<4x256xf32> to vector<1x256xf32>
    %23 = vector.broadcast %22 : vector<1x256xf32> to vector<8x256xf32>
    %24 = arith.addf %21, %23 : vector<8x256xf32>
    %cst_14 = arith.constant 0.000000e+00 : f32
    %25 = vector.broadcast %cst_14 : f32 to vector<8x256xf32>
    %26 = arith.maximumf %24, %25 : vector<8x256xf32>
    %27 = arith.truncf %26 : vector<8x256xf32> to vector<8x256xbf16>
    %c0_15 = arith.constant 0 : index
    %c0_16 = arith.constant 0 : index
    %28 = vector.load %arg4[%c0_15, %c0_16] : memref<256x2xbf16, #tpu.memory_space<vmem>>, vector<256x2xbf16>
    %cst_17 = arith.constant dense<0.000000e+00> : vector<8x2xf32>
    %29 = tpu.matmul %27, %28, %cst_17 {dimension_numbers = #tpu.dot_dimension_numbers<[1], [0], [0], [1], [0, 0, 1, 1], [], []>} : vector<8x256xbf16>, vector<256x2xbf16>, vector<8x2xf32> -> vector<8x2xf32>
    %30 = vector.extract_strided_slice %0 {offsets = [3, 0], sizes = [1, 2], strides = [1, 1]} : vector<4x256xf32> to vector<1x2xf32>
    %31 = vector.broadcast %30 : vector<1x2xf32> to vector<8x2xf32>
    %32 = arith.addf %29, %31 : vector<8x2xf32>
    %c0_18 = arith.constant 0 : index
    %c0_19 = arith.constant 0 : index
    %33 = vector.load %arg6[%c0_18, %c0_19] : memref<8x2xf32, #tpu.memory_space<vmem>>, vector<8x2xf32>
    tpu.vector_store %arg6[%c0_18, %c0_19], %32 {strides = array<i32>} : memref<8x2xf32, #tpu.memory_space<vmem>>, vector<8x2xf32>,
    return
  }
  func.func @transform_0(%arg0: i32) -> (i32, i32) {
    %c0_i32 = arith.constant 0 : i32
    %c0_i32_0 = arith.constant 0 : i32
    return %arg0, %c0_i32 : i32, i32
  }
  func.func @transform_1(%arg0: i32) -> (i32, i32) {
    %c0_i32 = arith.constant 0 : i32
    %c0_i32_0 = arith.constant 0 : i32
    %c0_i32_1 = arith.constant 0 : i32
    return %c0_i32, %c0_i32_0 : i32, i32
  }
  func.func @transform_2(%arg0: i32) -> (i32, i32, i32) {
    %c0_i32 = arith.constant 0 : i32
    %c0_i32_0 = arith.constant 0 : i32
    %c0_i32_1 = arith.constant 0 : i32
    %c0_i32_2 = arith.constant 0 : i32
    return %c0_i32, %c0_i32_0, %c0_i32_1 : i32, i32, i32
  }
  func.func @transform_3(%arg0: i32) -> (i32, i32) {
    %c0_i32 = arith.constant 0 : i32
    %c0_i32_0 = arith.constant 0 : i32
    %c0_i32_1 = arith.constant 0 : i32
    return %c0_i32, %c0_i32_0 : i32, i32
  }
  func.func @transform_4(%arg0: i32) -> (i32, i32) {
    %c0_i32 = arith.constant 0 : i32
    %c0_i32_0 = arith.constant 0 : i32
    %c0_i32_1 = arith.constant 0 : i32
    return %c0_i32, %c0_i32_0 : i32, i32
  }
  func.func @transform_5(%arg0: i32) -> (i32, i32) {
    %c0_i32 = arith.constant 0 : i32
    %c0_i32_0 = arith.constant 0 : i32
    return %arg0, %c0_i32 : i32, i32
  }
}

</mosaic_0001>

<llo_original>
// kernel: tpu_custom_call.1
$region0: #{tpu_custom_call.1}
  #allocation0 [shape = 'u32[]', space=smem, size = 0x4, offset = 0x4, fixed_abs, tag = 'smem constant byte address 0x4 - core index']
  #allocation1 [shape = 'u32[144,128]{1,0:T(1,128)}', space=vmem, size = 0x12000, scoped, tag = 'internal scratch']
  %s0 = inlined_call_operand.vmem [shape: bf16[8,24], index: 0, kind: input, shape index: {}]
  %s1 = inlined_call_operand.vmem [shape: bf16[24,256], index: 1, kind: input, shape index: {}]
  %s2 = inlined_call_operand.hbm [shape: bf16[2,256,256], index: 2, kind: input, shape index: {}]
  %s3 = inlined_call_operand.vmem [shape: bf16[256,2], index: 3, kind: input, shape index: {}]
  %s4 = inlined_call_operand.vmem [shape: f32[4,256], index: 4, kind: input, shape index: {}]
  %s5 = inlined_call_operand.vmem [shape: f32[8,2], index: 5, kind: output, shape index: {}]
  %s6 = sld [smem:[#allocation0]]
  $region34: #{tpu_custom_call.1} parent=0
    _
  %s8 = ssub.s32 1, %s6
  %s9 = scalar_select 0, %s8, %s6
  $region1: #{tpu_custom_call.1} parent=0
    #allocation2 [shape = 'u8[262144]{0}', space=vmem, size = 0x40000, scoped, tag = 'input window, operand 2, single buffered']
    #allocation3 [shape = 's32[1]{0}', space=sflag, size = 0x4, scoped, tag = 'scoped memory for tpu_custom_call.1']
    %10 = vsyncpa [#allocation3], 0
    // Predicated region
    $region2: #{tpu_custom_call.1} parent=1 // pred_check
      _
    $region3: #{tpu_custom_call.1} parent=1 // pred_check_branch
      %12 = sbr.rel (0) target = $region5
    $region4: #{tpu_custom_call.1} parent=1 // pred_region
      _
    $region5: #{tpu_custom_call.1} parent=1 // pred_fallthru
      _
    // Predicated region
    $region6: #{tpu_custom_call.1} parent=1 // pred_check
      _
    $region7: #{tpu_custom_call.1} parent=1 // pred_check_branch
      %14 = sbr.rel (0) target = $region9
    $region8: #{tpu_custom_call.1} parent=1 // pred_region
      _
    $region9: #{tpu_custom_call.1} parent=1 // pred_fallthru
      _
    // Predicated region
    $region10: #{tpu_custom_call.1} parent=1 // pred_check
      _
    $region11: #{tpu_custom_call.1} parent=1 // pred_check_branch
      %16 = sbr.rel (0) target = $region13
    $region12: #{tpu_custom_call.1} parent=1 // pred_region
      %s18 = ssub.s32 8192, 8192
      %19 = vsyncadd [#allocation3], %s18
      %s20 = sshll.u32 [#allocation2], 4
      %s21 = int_to_ptr.vmem [resolvable:$true] %s20
      %26 = dma.hbm_to_vmem [thread:$0]  %s2, 8192, %s21, [#allocation3], 128, 128, 8
    $region13: #{tpu_custom_call.1} parent=1 // pred_fallthru
      _
    // Predicated region
    $region14: #{tpu_custom_call.1} parent=1 // pred_check
      _
    $region15: #{tpu_custom_call.1} parent=1 // pred_check_branch
      %28 = sbr.rel (0) target = $region17
    $region16: #{tpu_custom_call.1} parent=1 // pred_region
      _
    $region17: #{tpu_custom_call.1} parent=1 // pred_fallthru
      _
    // Predicated region
    $region18: #{tpu_custom_call.1} parent=1 // pred_check
      _
    $region19: #{tpu_custom_call.1} parent=1 // pred_check_branch
      %30 = sbr.rel (0) target = $region21
    $region20: #{tpu_custom_call.1} parent=1 // pred_region
      _
    $region21: #{tpu_custom_call.1} parent=1 // pred_fallthru
      _
    // Predicated region
    $region22: #{tpu_custom_call.1} parent=1 // pred_check
      _
    $region23: #{tpu_custom_call.1} parent=1 // pred_check_branch
      %32 = sbr.rel (0) target = $region25
    $region24: #{tpu_custom_call.1} parent=1 // pred_region
      %33 = dma.done [#allocation3], 8192
    $region25: #{tpu_custom_call.1} parent=1 // pred_fallthru
      _
    %v35 = vld [vmem:[%s4] sm:$0xff]
    %v36 = vld [vmem:[%s0] sm:$0xf]
    %v37 = vld [vmem:[%s1] sm:$0xff]
    %v38 = vld [vmem:[%s1 + $0x8] sm:$0xff]
    %v39 = vld [vmem:[%s1 + $0x10] sm:$0xff]
    %v41 = vlaneseq
    %v42 = vshrl.u32 %v41, 7
    %v43 = vsub.s32 0, %v42
    %v44 = vrot.slane %v35, %v43
    %v45 = vlaneseq
    %v46 = vshrl.u32 %v45, 7
    %v47 = vsub.s32 4, %v46
    %v48 = vrot.slane %v35, %v47
    %v51 = vlaneseq
    %v52 = vshrl.u32 %v51, 7
    %v53 = vsub.s32 0, %v52
    %v54 = vrot.slane %v44, %v53
    %v55 = vlaneseq
    %v56 = vshrl.u32 %v55, 7
    %v57 = vsub.s32 0, %v56
    %v58 = vrot.slane %v48, %v57
    %v62 = vunpack.c.l.b16 %v37
    %v63 = vunpack.c.h.b16 %v37
    %v64 = vunpack.c.l.b16 %v38
    %v65 = vunpack.c.h.b16 %v38
    %v66 = vunpack.c.l.b16 %v39
    %v67 = vunpack.c.h.b16 %v39
    %v68 = vpack.c.b16 %v64, %v62
    %v69 = vpack.c.b16 %v65, %v63
    %v70 = vpack.c.b16 %v66, %v66
    %v71 = vpack.c.b16 %v67, %v67
    %vm74 = vcmask 195584
    %v76 = vsel %vm74, %v36, 0
    %vm78 = vcmask 1043456
    %v80 = vsel %vm78, %v70, 0
    %v83 = vsel %vm78, %v71, 0
    %85 = vmatprep.subr.bf16.mxu0 %v69
    %86 = vmatpush1.bf16.msra.mxu0 %v68
    %87 = vmatprep.subr.bf16.mxu0 %v83
    %88 = vmatpush1.bf16.msra.mxu0 %v80
    %89 = vmatprep.subr.bf16.mxu0 0
    %90 = vmatpush1.bf16.msra.mxu0 0
    %91 = vmatprep.subr.bf16.mxu0 0
    %92 = vmatpush1.bf16.msra.mxu0 0
    %93 = vmatprep.subr.bf16.mxu0 0
    %94 = vmatpush1.bf16.msra.mxu0 0
    %95 = vmatprep.subr.bf16.mxu0 0
    %96 = vmatpush1.bf16.msra.mxu0 0
    %97 = vmatprep.subr.bf16.mxu0 0
    %98 = vmatpush1.bf16.msra.mxu0 0
    %99 = vmatprep.subr.bf16.mxu0 0
    %100 = vmatpush1.bf16.msra.mxu0 0
    %101 = vmatprep.subr.bf16.mxu0 0
    %102 = vmatpush1.bf16.msra.mxu0 0
    %103 = vmatprep.subr.bf16.mxu0 0
    %104 = vmatpush1.bf16.msra.mxu0 0
    %105 = vmatprep.subr.bf16.mxu0 0
    %106 = vmatpush1.bf16.msra.mxu0 0
    %107 = vmatprep.subr.bf16.mxu0 0
    %108 = vmatpush1.bf16.msra.mxu0 0
    %109 = vmatprep.subr.bf16.mxu0 0
    %110 = vmatpush1.bf16.msra.mxu0 0
    %111 = vmatprep.subr.bf16.mxu0 0
    %112 = vmatpush1.bf16.msra.mxu0 0
    %113 = vmatprep.subr.bf16.mxu0 0
    %114 = vmatpush1.bf16.msra.mxu0 0
    %115 = vmatprep.subr.bf16.mxu0 0
    %116 = vmatpush1.bf16.msra.mxu0 0
    %117 = vmatprep.mubr.bf16.mxu0 0
    %118 = vmatmul.mubr.bf16.gmra.mrb[0].mxu0 %v76
    %v119 = vpop.f32.mrb[0].mxu0
    %v120 = vadd.f32 %v54, %v119
    %v121 = vpop.f32.mrb[0].mxu0
    %v122 = vadd.f32 %v58, %v121
    %v123 = vpop.f32.mrb[0].mxu0
    %v124 = vpop.f32.mrb[0].mxu0
    %125 = vdwg.mxu0
    %v126 = vmax.f32 %v120, 0.0
    %v127 = vmax.f32 %v122, 0.0
    %v128 = vpack.c.bf16 %v126, %v126
    %v129 = vpack.c.bf16 %v127, %v127
    %v130 = vld [vmem:[#allocation2] sm:$0xff]
    %v131 = vld [vmem:[#allocation2 + $0x8] sm:$0xff]
    %v132 = vld [vmem:[#allocation2 + $0x10] sm:$0xff]
    %v133 = vld [vmem:[#allocation2 + $0x18] sm:$0xff]
    %v134 = vld [vmem:[#allocation2 + $0x20] sm:$0xff]
    %v135 = vld [vmem:[#allocation2 + $0x28] sm:$0xff]
    %v136 = vld [vmem:[#allocation2 + $0x30] sm:$0xff]
    %v137 = vld [vmem:[#allocation2 + $0x38] sm:$0xff]
    %v138 = vld [vmem:[#allocation2 + $0x40] sm:$0xff]
    %v139 = vld [vmem:[#allocation2 + $0x48] sm:$0xff]
    %v140 = vld [vmem:[#allocation2 + $0x50] sm:$0xff]
    %v141 = vld [vmem:[#allocation2 + $0x58] sm:$0xff]
    %v142 = vld [vmem:[#allocation2 + $0x60] sm:$0xff]
    %v143 = vld [vmem:[#allocation2 + $0x68] sm:$0xff]
    %v144 = vld [vmem:[#allocation2 + $0x70] sm:$0xff]
    %v145 = vld [vmem:[#allocation2 + $0x78] sm:$0xff]
    %v146 = vld [vmem:[#allocation2 + $0x80] sm:$0xff]
    %v147 = vld [vmem:[#allocation2 + $0x88] sm:$0xff]
    %v148 = vld [vmem:[#allocation2 + $0x90] sm:$0xff]
    %v149 = vld [vmem:[#allocation2 + $0x98] sm:$0xff]
    %v150 = vld [vmem:[#allocation2 + $0xa0] sm:$0xff]
    %v151 = vld [vmem:[#allocation2 + $0xa8] sm:$0xff]
    %v152 = vld [vmem:[#allocation2 + $0xb0] sm:$0xff]
    %v153 = vld [vmem:[#allocation2 + $0xb8] sm:$0xff]
    %v154 = vld [vmem:[#allocation2 + $0xc0] sm:$0xff]
    %v155 = vld [vmem:[#allocation2 + $0xc8] sm:$0xff]
    %v156 = vld [vmem:[#allocation2 + $0xd0] sm:$0xff]
    %v157 = vld [vmem:[#allocation2 + $0xd8] sm:$0xff]
    %v158 = vld [vmem:[#allocation2 + $0xe0] sm:$0xff]
    %v159 = vld [vmem:[#allocation2 + $0xe8] sm:$0xff]
    %v160 = vld [vmem:[#allocation2 + $0xf0] sm:$0xff]
    %v161 = vld [vmem:[#allocation2 + $0xf8] sm:$0xff]
    %v162 = vlaneseq
    %v163 = vshrl.u32 %v162, 7
    %v164 = vsub.s32 1, %v163
    %v165 = vrot.slane %v35, %v164
    %v166 = vlaneseq
    %v167 = vshrl.u32 %v166, 7
    %v168 = vsub.s32 5, %v167
    %v169 = vrot.slane %v35, %v168
    %v172 = vlaneseq
    %v173 = vshrl.u32 %v172, 7
    %v174 = vsub.s32 1, %v173
    %v175 = vrot.slane %v165, %v174
    %v176 = vlaneseq
    %v177 = vshrl.u32 %v176, 7
    %v178 = vsub.s32 1, %v177
    %v179 = vrot.slane %v169, %v178
    %v212 = vunpack.c.l.b16 %v130
    %v213 = vunpack.c.h.b16 %v130
    %v214 = vunpack.c.l.b16 %v131
    %v215 = vunpack.c.h.b16 %v131
    %v216 = vunpack.c.l.b16 %v132
    %v217 = vunpack.c.h.b16 %v132
    %v218 = vunpack.c.l.b16 %v133
    %v219 = vunpack.c.h.b16 %v133
    %v220 = vunpack.c.l.b16 %v134
    %v221 = vunpack.c.h.b16 %v134
    %v222 = vunpack.c.l.b16 %v135
    %v223 = vunpack.c.h.b16 %v135
    %v224 = vunpack.c.l.b16 %v136
    %v225 = vunpack.c.h.b16 %v136
    %v226 = vunpack.c.l.b16 %v137
    %v227 = vunpack.c.h.b16 %v137
    %v228 = vunpack.c.l.b16 %v138
    %v229 = vunpack.c.h.b16 %v138
    %v230 = vunpack.c.l.b16 %v139
    %v231 = vunpack.c.h.b16 %v139
    %v232 = vunpack.c.l.b16 %v140
    %v233 = vunpack.c.h.b16 %v140
    %v234 = vunpack.c.l.b16 %v141
    %v235 = vunpack.c.h.b16 %v141
    %v236 = vunpack.c.l.b16 %v142
    %v237 = vunpack.c.h.b16 %v142
    %v238 = vunpack.c.l.b16 %v143
    %v239 = vunpack.c.h.b16 %v143
    %v240 = vunpack.c.l.b16 %v144
    %v241 = vunpack.c.h.b16 %v144
    %v242 = vunpack.c.l.b16 %v145
    %v243 = vunpack.c.h.b16 %v145
    %v244 = vunpack.c.l.b16 %v146
    %v245 = vunpack.c.h.b16 %v146
    %v246 = vunpack.c.l.b16 %v147
    %v247 = vunpack.c.h.b16 %v147
    %v248 = vunpack.c.l.b16 %v148
    %v249 = vunpack.c.h.b16 %v148
    %v250 = vunpack.c.l.b16 %v149
    %v251 = vunpack.c.h.b16 %v149
    %v252 = vunpack.c.l.b16 %v150
    %v253 = vunpack.c.h.b16 %v150
    %v254 = vunpack.c.l.b16 %v151
    %v255 = vunpack.c.h.b16 %v151
    %v256 = vunpack.c.l.b16 %v152
    %v257 = vunpack.c.h.b16 %v152
    %v258 = vunpack.c.l.b16 %v153
    %v259 = vunpack.c.h.b16 %v153
    %v260 = vunpack.c.l.b16 %v154
    %v261 = vunpack.c.h.b16 %v154
    %v262 = vunpack.c.l.b16 %v155
    %v263 = vunpack.c.h.b16 %v155
    %v264 = vunpack.c.l.b16 %v156
    %v265 = vunpack.c.h.b16 %v156
    %v266 = vunpack.c.l.b16 %v157
    %v267 = vunpack.c.h.b16 %v157
    %v268 = vunpack.c.l.b16 %v158
    %v269 = vunpack.c.h.b16 %v158
    %v270 = vunpack.c.l.b16 %v159
    %v271 = vunpack.c.h.b16 %v159
    %v272 = vunpack.c.l.b16 %v160
    %v273 = vunpack.c.h.b16 %v160
    %v274 = vunpack.c.l.b16 %v161
    %v275 = vunpack.c.h.b16 %v161
    %v276 = vpack.c.b16 %v214, %v212
    %v277 = vpack.c.b16 %v215, %v213
    %v278 = vpack.c.b16 %v218, %v216
    %v279 = vpack.c.b16 %v219, %v217
    %v280 = vpack.c.b16 %v222, %v220
    %v281 = vpack.c.b16 %v223, %v221
    %v282 = vpack.c.b16 %v226, %v224
    %v283 = vpack.c.b16 %v227, %v225
    %v284 = vpack.c.b16 %v230, %v228
    %v285 = vpack.c.b16 %v231, %v229
    %v286 = vpack.c.b16 %v234, %v232
    %v287 = vpack.c.b16 %v235, %v233
    %v288 = vpack.c.b16 %v238, %v236
    %v289 = vpack.c.b16 %v239, %v237
    %v290 = vpack.c.b16 %v242, %v240
    %v291 = vpack.c.b16 %v243, %v241
    %v292 = vpack.c.b16 %v246, %v244
    %v293 = vpack.c.b16 %v247, %v245
    %v294 = vpack.c.b16 %v250, %v248
    %v295 = vpack.c.b16 %v251, %v249
    %v296 = vpack.c.b16 %v254, %v252
    %v297 = vpack.c.b16 %v255, %v253
    %v298 = vpack.c.b16 %v258, %v256
    %v299 = vpack.c.b16 %v259, %v257
    %v300 = vpack.c.b16 %v262, %v260
    %v301 = vpack.c.b16 %v263, %v261
    %v302 = vpack.c.b16 %v266, %v264
    %v303 = vpack.c.b16 %v267, %v265
    %v304 = vpack.c.b16 %v270, %v268
    %v305 = vpack.c.b16 %v271, %v269
    %v306 = vpack.c.b16 %v274, %v272
    %v307 = vpack.c.b16 %v275, %v273
    %340 = vmatprep.subr.bf16.mxu0 %v277
    %341 = vmatpush1.bf16.msra.mxu0 %v276
    %342 = vmatprep.subr.bf16.mxu0 %v279
    %343 = vmatpush1.bf16.msra.mxu0 %v278
    %344 = vmatprep.subr.bf16.mxu0 %v281
    %345 = vmatpush1.bf16.msra.mxu0 %v280
    %346 = vmatprep.subr.bf16.mxu0 %v283
    %347 = vmatpush1.bf16.msra.mxu0 %v282
    %348 = vmatprep.subr.bf16.mxu0 %v285
    %349 = vmatpush1.bf16.msra.mxu0 %v284
    %350 = vmatprep.subr.bf16.mxu0 %v287
    %351 = vmatpush1.bf16.msra.mxu0 %v286
    %352 = vmatprep.subr.bf16.mxu0 %v289
    %353 = vmatpush1.bf16.msra.mxu0 %v288
    %354 = vmatprep.subr.bf16.mxu0 %v291
    %355 = vmatpush1.bf16.msra.mxu0 %v290
    %356 = vmatprep.subr.bf16.mxu0 %v293
    %357 = vmatpush1.bf16.msra.mxu0 %v292
    %358 = vmatprep.subr.bf16.mxu0 %v295
    %359 = vmatpush1.bf16.msra.mxu0 %v294
    %360 = vmatprep.subr.bf16.mxu0 %v297
    %361 = vmatpush1.bf16.msra.mxu0 %v296
    %362 = vmatprep.subr.bf16.mxu0 %v299
    %363 = vmatpush1.bf16.msra.mxu0 %v298
    %364 = vmatprep.subr.bf16.mxu0 %v301
    %365 = vmatpush1.bf16.msra.mxu0 %v300
    %366 = vmatprep.subr.bf16.mxu0 %v303
    %367 = vmatpush1.bf16.msra.mxu0 %v302
    %368 = vmatprep.subr.bf16.mxu0 %v305
    %369 = vmatpush1.bf16.msra.mxu0 %v304
    %370 = vmatprep.subr.bf16.mxu0 %v307
    %371 = vmatpush1.bf16.msra.mxu0 %v306
    %372 = vmatprep.mubr.bf16.mxu0 %v129
    %373 = vmatmul.mubr.bf16.gmra.mrb[0].mxu0 %v128
    %v374 = vpop.f32.mrb[0].mxu0
    %v375 = vadd.f32 %v175, %v374
    %v376 = vpop.f32.mrb[0].mxu0
    %v377 = vadd.f32 %v179, %v376
    %v378 = vpop.f32.mrb[0].mxu0
    %v379 = vpop.f32.mrb[0].mxu0
    %380 = vdwg.mxu0
    %v381 = vmax.f32 %v375, 0.0
    %v382 = vmax.f32 %v377, 0.0
    %v383 = vpack.c.bf16 %v381, %v381
    %v384 = vpack.c.bf16 %v382, %v382
    %s385 = scalar_lea.vmem [#allocation2], 256
    %v386 = vld [vmem:[%s385] sm:$0xff]
    %v387 = vld [vmem:[%s385 + $0x8] sm:$0xff]
    %v388 = vld [vmem:[%s385 + $0x10] sm:$0xff]
    %v389 = vld [vmem:[%s385 + $0x18] sm:$0xff]
    %v390 = vld [vmem:[%s385 + $0x20] sm:$0xff]
    %v391 = vld [vmem:[%s385 + $0x28] sm:$0xff]
    %v392 = vld [vmem:[%s385 + $0x30] sm:$0xff]
    %v393 = vld [vmem:[%s385 + $0x38] sm:$0xff]
    %v394 = vld [vmem:[%s385 + $0x40] sm:$0xff]
    %v395 = vld [vmem:[%s385 + $0x48] sm:$0xff]
    %v396 = vld [vmem:[%s385 + $0x50] sm:$0xff]
    %v397 = vld [vmem:[%s385 + $0x58] sm:$0xff]
    %v398 = vld [vmem:[%s385 + $0x60] sm:$0xff]
    %v399 = vld [vmem:[%s385 + $0x68] sm:$0xff]
    %v400 = vld [vmem:[%s385 + $0x70] sm:$0xff]
    %v401 = vld [vmem:[%s385 + $0x78] sm:$0xff]
    %v402 = vld [vmem:[%s385 + $0x80] sm:$0xff]
    %v403 = vld [vmem:[%s385 + $0x88] sm:$0xff]
    %v404 = vld [vmem:[%s385 + $0x90] sm:$0xff]
    %v405 = vld [vmem:[%s385 + $0x98] sm:$0xff]
    %v406 = vld [vmem:[%s385 + $0xa0] sm:$0xff]
    %v407 = vld [vmem:[%s385 + $0xa8] sm:$0xff]
    %v408 = vld [vmem:[%s385 + $0xb0] sm:$0xff]
    %v409 = vld [vmem:[%s385 + $0xb8] sm:$0xff]
    %v410 = vld [vmem:[%s385 + $0xc0] sm:$0xff]
    %v411 = vld [vmem:[%s385 + $0xc8] sm:$0xff]
    %v412 = vld [vmem:[%s385 + $0xd0] sm:$0xff]
    %v413 = vld [vmem:[%s385 + $0xd8] sm:$0xff]
    %v414 = vld [vmem:[%s385 + $0xe0] sm:$0xff]
    %v415 = vld [vmem:[%s385 + $0xe8] sm:$0xff]
    %v416 = vld [vmem:[%s385 + $0xf0] sm:$0xff]
    %v417 = vld [vmem:[%s385 + $0xf8] sm:$0xff]
    %v418 = vlaneseq
    %v419 = vshrl.u32 %v418, 7
    %v420 = vsub.s32 2, %v419
    %v421 = vrot.slane %v35, %v420
    %v422 = vlaneseq
    %v423 = vshrl.u32 %v422, 7
    %v424 = vsub.s32 6, %v423
    %v425 = vrot.slane %v35, %v424
    %v428 = vlaneseq
    %v429 = vshrl.u32 %v428, 7
    %v430 = vsub.s32 2, %v429
    %v431 = vrot.slane %v421, %v430
    %v432 = vlaneseq
    %v433 = vshrl.u32 %v432, 7
    %v434 = vsub.s32 2, %v433
    %v435 = vrot.slane %v425, %v434
    %v468 = vunpack.c.l.b16 %v386
    %v469 = vunpack.c.h.b16 %v386
    %v470 = vunpack.c.l.b16 %v387
    %v471 = vunpack.c.h.b16 %v387
    %v472 = vunpack.c.l.b16 %v388
    %v473 = vunpack.c.h.b16 %v388
    %v474 = vunpack.c.l.b16 %v389
    %v475 = vunpack.c.h.b16 %v389
    %v476 = vunpack.c.l.b16 %v390
    %v477 = vunpack.c.h.b16 %v390
    %v478 = vunpack.c.l.b16 %v391
    %v479 = vunpack.c.h.b16 %v391
    %v480 = vunpack.c.l.b16 %v392
    %v481 = vunpack.c.h.b16 %v392
    %v482 = vunpack.c.l.b16 %v393
    %v483 = vunpack.c.h.b16 %v393
    %v484 = vunpack.c.l.b16 %v394
    %v485 = vunpack.c.h.b16 %v394
    %v486 = vunpack.c.l.b16 %v395
    %v487 = vunpack.c.h.b16 %v395
    %v488 = vunpack.c.l.b16 %v396
    %v489 = vunpack.c.h.b16 %v396
    %v490 = vunpack.c.l.b16 %v397
    %v491 = vunpack.c.h.b16 %v397
    %v492 = vunpack.c.l.b16 %v398
    %v493 = vunpack.c.h.b16 %v398
    %v494 = vunpack.c.l.b16 %v399
    %v495 = vunpack.c.h.b16 %v399
    %v496 = vunpack.c.l.b16 %v400
    %v497 = vunpack.c.h.b16 %v400
    %v498 = vunpack.c.l.b16 %v401
    %v499 = vunpack.c.h.b16 %v401
    %v500 = vunpack.c.l.b16 %v402
    %v501 = vunpack.c.h.b16 %v402
    %v502 = vunpack.c.l.b16 %v403
    %v503 = vunpack.c.h.b16 %v403
    %v504 = vunpack.c.l.b16 %v404
    %v505 = vunpack.c.h.b16 %v404
    %v506 = vunpack.c.l.b16 %v405
    %v507 = vunpack.c.h.b16 %v405
    %v508 = vunpack.c.l.b16 %v406
    %v509 = vunpack.c.h.b16 %v406
    %v510 = vunpack.c.l.b16 %v407
    %v511 = vunpack.c.h.b16 %v407
    %v512 = vunpack.c.l.b16 %v408
    %v513 = vunpack.c.h.b16 %v408
    %v514 = vunpack.c.l.b16 %v409
    %v515 = vunpack.c.h.b16 %v409
    %v516 = vunpack.c.l.b16 %v410
    %v517 = vunpack.c.h.b16 %v410
    %v518 = vunpack.c.l.b16 %v411
    %v519 = vunpack.c.h.b16 %v411
    %v520 = vunpack.c.l.b16 %v412
    %v521 = vunpack.c.h.b16 %v412
    %v522 = vunpack.c.l.b16 %v413
    %v523 = vunpack.c.h.b16 %v413
    %v524 = vunpack.c.l.b16 %v414
    %v525 = vunpack.c.h.b16 %v414
    %v526 = vunpack.c.l.b16 %v415
    %v527 = vunpack.c.h.b16 %v415
    %v528 = vunpack.c.l.b16 %v416
    %v529 = vunpack.c.h.b16 %v416
    %v530 = vunpack.c.l.b16 %v417
    %v531 = vunpack.c.h.b16 %v417
    %v532 = vpack.c.b16 %v470, %v468
    %v533 = vpack.c.b16 %v471, %v469
    %v534 = vpack.c.b16 %v474, %v472
    %v535 = vpack.c.b16 %v475, %v473
    %v536 = vpack.c.b16 %v478, %v476
    %v537 = vpack.c.b16 %v479, %v477
    %v538 = vpack.c.b16 %v482, %v480
    %v539 = vpack.c.b16 %v483, %v481
    %v540 = vpack.c.b16 %v486, %v484
    %v541 = vpack.c.b16 %v487, %v485
    %v542 = vpack.c.b16 %v490, %v488
    %v543 = vpack.c.b16 %v491, %v489
    %v544 = vpack.c.b16 %v494, %v492
    %v545 = vpack.c.b16 %v495, %v493
    %v546 = vpack.c.b16 %v498, %v496
    %v547 = vpack.c.b16 %v499, %v497
    %v548 = vpack.c.b16 %v502, %v500
    %v549 = vpack.c.b16 %v503, %v501
    %v550 = vpack.c.b16 %v506, %v504
    %v551 = vpack.c.b16 %v507, %v505
    %v552 = vpack.c.b16 %v510, %v508
    %v553 = vpack.c.b16 %v511, %v509
    %v554 = vpack.c.b16 %v514, %v512
    %v555 = vpack.c.b16 %v515, %v513
    %v556 = vpack.c.b16 %v518, %v516
    %v557 = vpack.c.b16 %v519, %v517
    %v558 = vpack.c.b16 %v522, %v520
    %v559 = vpack.c.b16 %v523, %v521
    %v560 = vpack.c.b16 %v526, %v524
    %v561 = vpack.c.b16 %v527, %v525
    %v562 = vpack.c.b16 %v530, %v528
    %v563 = vpack.c.b16 %v531, %v529
    %596 = vmatprep.subr.bf16.mxu0 %v533
    %597 = vmatpush1.bf16.msra.mxu0 %v532
    %598 = vmatprep.subr.bf16.mxu0 %v535
    %599 = vmatpush1.bf16.msra.mxu0 %v534
    %600 = vmatprep.subr.bf16.mxu0 %v537
    %601 = vmatpush1.bf16.msra.mxu0 %v536
    %602 = vmatprep.subr.bf16.mxu0 %v539
    %603 = vmatpush1.bf16.msra.mxu0 %v538
    %604 = vmatprep.subr.bf16.mxu0 %v541
    %605 = vmatpush1.bf16.msra.mxu0 %v540
    %606 = vmatprep.subr.bf16.mxu0 %v543
    %607 = vmatpush1.bf16.msra.mxu0 %v542
    %608 = vmatprep.subr.bf16.mxu0 %v545
    %609 = vmatpush1.bf16.msra.mxu0 %v544
    %610 = vmatprep.subr.bf16.mxu0 %v547
    %611 = vmatpush1.bf16.msra.mxu0 %v546
    %612 = vmatprep.subr.bf16.mxu0 %v549
    %613 = vmatpush1.bf16.msra.mxu0 %v548
    %614 = vmatprep.subr.bf16.mxu0 %v551
    %615 = vmatpush1.bf16.msra.mxu0 %v550
    %616 = vmatprep.subr.bf16.mxu0 %v553
    %617 = vmatpush1.bf16.msra.mxu0 %v552
    %618 = vmatprep.subr.bf16.mxu0 %v555
    %619 = vmatpush1.bf16.msra.mxu0 %v554
    %620 = vmatprep.subr.bf16.mxu0 %v557
    %621 = vmatpush1.bf16.msra.mxu0 %v556
    %622 = vmatprep.subr.bf16.mxu0 %v559
    %623 = vmatpush1.bf16.msra.mxu0 %v558
    %624 = vmatprep.subr.bf16.mxu0 %v561
    %625 = vmatpush1.bf16.msra.mxu0 %v560
    %626 = vmatprep.subr.bf16.mxu0 %v563
    %627 = vmatpush1.bf16.msra.mxu0 %v562
    %628 = vmatprep.mubr.bf16.mxu0 %v384
    %629 = vmatmul.mubr.bf16.gmra.mrb[0].mxu0 %v383
    %v630 = vpop.f32.mrb[0].mxu0
    %v631 = vadd.f32 %v431, %v630
    %v632 = vpop.f32.mrb[0].mxu0
    %v633 = vadd.f32 %v435, %v632
    %v634 = vpop.f32.mrb[0].mxu0
    %v635 = vpop.f32.mrb[0].mxu0
    %636 = vdwg.mxu0
    %v637 = vmax.f32 %v631, 0.0
    %v638 = vmax.f32 %v633, 0.0
    %v639 = vpack.c.bf16 %v637, %v637
    %v640 = vpack.c.bf16 %v638, %v638
    %v641 = vld [vmem:[%s3] sm:$0xf]
    %v642 = vld [vmem:[%s3 + $0x4] sm:$0xf]
    %v643 = vld [vmem:[%s3 + $0x8] sm:$0xf]
    %v644 = vld [vmem:[%s3 + $0xc] sm:$0xf]
    %v645 = vld [vmem:[%s3 + $0x10] sm:$0xf]
    %v646 = vld [vmem:[%s3 + $0x14] sm:$0xf]
    %v647 = vld [vmem:[%s3 + $0x18] sm:$0xf]
    %v648 = vld [vmem:[%s3 + $0x1c] sm:$0xf]
    %v649 = vld [vmem:[%s3 + $0x20] sm:$0xf]
    %v650 = vld [vmem:[%s3 + $0x24] sm:$0xf]
    %v651 = vld [vmem:[%s3 + $0x28] sm:$0xf]
    %v652 = vld [vmem:[%s3 + $0x2c] sm:$0xf]
    %v653 = vld [vmem:[%s3 + $0x30] sm:$0xf]
    %v654 = vld [vmem:[%s3 + $0x34] sm:$0xf]
    %v655 = vld [vmem:[%s3 + $0x38] sm:$0xf]
    %v656 = vld [vmem:[%s3 + $0x3c] sm:$0xf]
    %v657 = vld [vmem:[%s3 + $0x40] sm:$0xf]
    %v658 = vld [vmem:[%s3 + $0x44] sm:$0xf]
    %v659 = vld [vmem:[%s3 + $0x48] sm:$0xf]
    %v660 = vld [vmem:[%s3 + $0x4c] sm:$0xf]
    %v661 = vld [vmem:[%s3 + $0x50] sm:$0xf]
    %v662 = vld [vmem:[%s3 + $0x54] sm:$0xf]
    %v663 = vld [vmem:[%s3 + $0x58] sm:$0xf]
    %v664 = vld [vmem:[%s3 + $0x5c] sm:$0xf]
    %v665 = vld [vmem:[%s3 + $0x60] sm:$0xf]
    %v666 = vld [vmem:[%s3 + $0x64] sm:$0xf]
    %v667 = vld [vmem:[%s3 + $0x68] sm:$0xf]
    %v668 = vld [vmem:[%s3 + $0x6c] sm:$0xf]
    %v669 = vld [vmem:[%s3 + $0x70] sm:$0xf]
    %v670 = vld [vmem:[%s3 + $0x74] sm:$0xf]
    %v671 = vld [vmem:[%s3 + $0x78] sm:$0xf]
    %v672 = vld [vmem:[%s3 + $0x7c] sm:$0xf]
    %v673 = vlaneseq
    %v674 = vshrl.u32 %v673, 7
    %v675 = vsub.s32 3, %v674
    %v676 = vrot.slane %v35, %v675
    %v709 = vunpack.c.l.b16 %v641
    %v710 = vunpack.c.l.b16 %v642
    %v711 = vunpack.c.l.b16 %v643
    %v712 = vunpack.c.l.b16 %v644
    %v713 = vunpack.c.l.b16 %v645
    %v714 = vunpack.c.l.b16 %v646
    %v715 = vunpack.c.l.b16 %v647
    %v716 = vunpack.c.l.b16 %v648
    %v717 = vunpack.c.l.b16 %v649
    %v718 = vunpack.c.l.b16 %v650
    %v719 = vunpack.c.l.b16 %v651
    %v720 = vunpack.c.l.b16 %v652
    %v721 = vunpack.c.l.b16 %v653
    %v722 = vunpack.c.l.b16 %v654
    %v723 = vunpack.c.l.b16 %v655
    %v724 = vunpack.c.l.b16 %v656
    %v725 = vunpack.c.l.b16 %v657
    %v726 = vunpack.c.l.b16 %v658
    %v727 = vunpack.c.l.b16 %v659
    %v728 = vunpack.c.l.b16 %v660
    %v729 = vunpack.c.l.b16 %v661
    %v730 = vunpack.c.l.b16 %v662
    %v731 = vunpack.c.l.b16 %v663
    %v732 = vunpack.c.l.b16 %v664
    %v733 = vunpack.c.l.b16 %v665
    %v734 = vunpack.c.l.b16 %v666
    %v735 = vunpack.c.l.b16 %v667
    %v736 = vunpack.c.l.b16 %v668
    %v737 = vunpack.c.l.b16 %v669
    %v738 = vunpack.c.l.b16 %v670
    %v739 = vunpack.c.l.b16 %v671
    %v740 = vunpack.c.l.b16 %v672
    %v741 = vpack.c.b16 %v710, %v709
    %v742 = vpack.c.b16 %v712, %v711
    %v743 = vpack.c.b16 %v714, %v713
    %v744 = vpack.c.b16 %v716, %v715
    %v745 = vpack.c.b16 %v718, %v717
    %v746 = vpack.c.b16 %v720, %v719
    %v747 = vpack.c.b16 %v722, %v721
    %v748 = vpack.c.b16 %v724, %v723
    %v749 = vpack.c.b16 %v726, %v725
    %v750 = vpack.c.b16 %v728, %v727
    %v751 = vpack.c.b16 %v730, %v729
    %v752 = vpack.c.b16 %v732, %v731
    %v753 = vpack.c.b16 %v734, %v733
    %v754 = vpack.c.b16 %v736, %v735
    %v755 = vpack.c.b16 %v738, %v737
    %v756 = vpack.c.b16 %v740, %v739
    %773 = vmatprep.subr.bf16.mxu0 0
    %774 = vmatpush1.bf16.msra.mxu0 %v741
    %775 = vmatprep.subr.bf16.mxu0 0
    %776 = vmatpush1.bf16.msra.mxu0 %v742
    %777 = vmatprep.subr.bf16.mxu0 0
    %778 = vmatpush1.bf16.msra.mxu0 %v743
    %779 = vmatprep.subr.bf16.mxu0 0
    %780 = vmatpush1.bf16.msra.mxu0 %v744
    %781 = vmatprep.subr.bf16.mxu0 0
    %782 = vmatpush1.bf16.msra.mxu0 %v745
    %783 = vmatprep.subr.bf16.mxu0 0
    %784 = vmatpush1.bf16.msra.mxu0 %v746
    %785 = vmatprep.subr.bf16.mxu0 0
    %786 = vmatpush1.bf16.msra.mxu0 %v747
    %787 = vmatprep.subr.bf16.mxu0 0
    %788 = vmatpush1.bf16.msra.mxu0 %v748
    %789 = vmatprep.subr.bf16.mxu0 0
    %790 = vmatpush1.bf16.msra.mxu0 %v749
    %791 = vmatprep.subr.bf16.mxu0 0
    %792 = vmatpush1.bf16.msra.mxu0 %v750
    %793 = vmatprep.subr.bf16.mxu0 0
    %794 = vmatpush1.bf16.msra.mxu0 %v751
    %795 = vmatprep.subr.bf16.mxu0 0
    %796 = vmatpush1.bf16.msra.mxu0 %v752
    %797 = vmatprep.subr.bf16.mxu0 0
    %798 = vmatpush1.bf16.msra.mxu0 %v753
    %799 = vmatprep.subr.bf16.mxu0 0
    %800 = vmatpush1.bf16.msra.mxu0 %v754
    %801 = vmatprep.subr.bf16.mxu0 0
    %802 = vmatpush1.bf16.msra.mxu0 %v755
    %803 = vmatprep.subr.bf16.mxu0 0
    %804 = vmatpush1.bf16.msra.mxu0 %v756
    %805 = vmatprep.mubr.bf16.mxu0 %v640
    %806 = vmatmul.mubr.bf16.gmra.mrb[0].mxu0 %v639
    %v807 = vpop.f32.mrb[0].mxu0
    %v808 = vadd.f32 %v676, %v807
    %v809 = vpop.f32.mrb[0].mxu0
    %v810 = vpop.f32.mrb[0].mxu0
    %v811 = vpop.f32.mrb[0].mxu0
    %812 = vdwg.mxu0
    %vm813 = vcmask 15360
    %814 = vst.msk [vmem:[%s5] sm:$0xff] %vm813, %v808
    // Predicated region
    $region26: #{tpu_custom_call.1} parent=1 // pred_check
      _
    $region27: #{tpu_custom_call.1} parent=1 // pred_check_branch
      %816 = sbr.rel (0) target = $region29
    $region28: #{tpu_custom_call.1} parent=1 // pred_region
      _
    $region29: #{tpu_custom_call.1} parent=1 // pred_fallthru
      _
    // Predicated region
    $region30: #{tpu_custom_call.1} parent=1 // pred_check
      _
    $region31: #{tpu_custom_call.1} parent=1 // pred_check_branch
      %818 = sbr.rel (0) target = $region33
    $region32: #{tpu_custom_call.1} parent=1 // pred_region
      _
    $region33: #{tpu_custom_call.1} parent=1 // pred_fallthru
      _
    %819 = vsyncpa [#allocation3], 1

</llo_original>
